<compile_context>
chip_gen: v5e
topology: v5e:2x2
jax: 0.10.0
libtpu: 0.0.40
codegen_flags: <defaults>
</compile_context>

<pallas_src>
import math
import jax
import jax.numpy as jnp
from jax.experimental import pallas as pl
from jax.experimental.pallas import tpu as pltpu


_INV_SQRT2 = 1.0 / math.sqrt(2.0)


def mlp_kernel(x_ref, wa_ref, wb_ref, o_ref, acc_ref):
    """One (row-tile, hidden-tile) step of  y = gelu(x @ WA) @ WB.

    x_ref:   (tm, d)   input row tile (resident across the hidden axis)
    wa_ref:  (d, th)   hidden-slice of A.weight.T
    wb_ref:  (th, d)   hidden-slice of B.weight.T
    o_ref:   (tm, d)   output row tile (same block across the hidden axis)
    acc_ref: (tm, d)   f32 accumulator scratch
    """
    k = pl.program_id(1)

    @pl.when(k == 0)
    def _():
        acc_ref[...] = jnp.zeros_like(acc_ref)

    # First projection on the MXU in the operands' native dtype; f32 accumulate.
    h = jnp.dot(x_ref[...], wa_ref[...], preferred_element_type=jnp.float32)

    # Exact (erf-based) GELU on the f32 slab -- matches nn.GELU() default.
    h = 0.5 * h * (1.0 + jax.lax.erf(h * jnp.float32(_INV_SQRT2)))

    # Second projection: this hidden tile's partial contribution to the output.
    acc_ref[...] += jnp.dot(h.astype(wb_ref.dtype), wb_ref[...],
                            preferred_element_type=jnp.float32)

    @pl.when(k == pl.num_programs(1) - 1)
    def _():
        o_ref[...] = acc_ref[...].astype(o_ref.dtype)


def _round_up(x, m):
    return (x + m - 1) // m * m


def mlp_forward(x, wa, wb, *, tm=256, th=512):
    """Tensor-parallel MLP shard forward: y = gelu(x @ wa) @ wb.

    x : (N, d)       activations (rows = tokens, features on the lane axis)
    wa: (d, hidden)  A.weight.T  (transpose done once at parameter-load time)
    wb: (hidden, d)  B.weight.T
    """
    N, d = x.shape
    d_wa, hidden = wa.shape
    assert d_wa == d and wb.shape == (hidden, d)

    # Hidden-axis tile: lane-aligned (multiple of 128) or the full extent.
    th = min(th, hidden)
    if hidden % th != 0 or (th != hidden and th % 128 != 0):
        th = hidden

    # Row tile: sublane-aligned; pad N so the grid divides evenly.
    tm = min(tm, _round_up(N, 8))
    n_pad = _round_up(N, tm)
    xp = x if n_pad == N else jnp.pad(x, ((0, n_pad - N), (0, 0)))

    # VMEM budget: double-buffered in/out/weight tiles + f32 accumulator.
    vmem_bytes = (2 * tm * d * xp.dtype.itemsize        # x tiles
                  + 2 * d * th * wa.dtype.itemsize      # WA tiles
                  + 2 * th * d * wb.dtype.itemsize      # WB tiles
                  + 2 * tm * d * xp.dtype.itemsize      # out tiles
                  + tm * d * 4)                         # accumulator
    vmem_limit = min(max(int(vmem_bytes * 3 // 2), 32 * 1024 * 1024),
                     64 * 1024 * 1024)                  # fits v7x's 64 MiB/TC

    grid = (n_pad // tm, hidden // th)
    y = pl.pallas_call(
        mlp_kernel,
        out_shape=jax.ShapeDtypeStruct((n_pad, d), x.dtype),
        grid_spec=pltpu.PrefetchScalarGridSpec(
            num_scalar_prefetch=0,
            grid=grid,
            in_specs=[
                pl.BlockSpec((tm, d), lambda i, k: (i, 0)),   # x row tile
                pl.BlockSpec((d, th), lambda i, k: (0, k)),   # WA hidden slice
                pl.BlockSpec((th, d), lambda i, k: (k, 0)),   # WB hidden slice
            ],
            out_specs=pl.BlockSpec((tm, d), lambda i, k: (i, 0)),
            scratch_shapes=[pltpu.VMEM((tm, d), jnp.float32)],
        ),
        compiler_params=pltpu.CompilerParams(
            dimension_semantics=("parallel", "arbitrary"),
            vmem_limit_bytes=vmem_limit),
    )(xp, wa, wb)
    return y[:N] if n_pad != N else y


if __name__ == "__main__":
    # Shapes consistent with the module: d=128, world_size=2 -> hidden=4*d/ws=256.
    # d and hidden are multiples of 128, so every load/store is lane-dense.
    d = 128
    world_size = 2
    hidden = 4 * d // world_size     # 256 (this shard's slice of the MLP)
    N = 256                          # tokens (batch * seq)

    key = jax.random.PRNGKey(0)
    kx, ka, kb = jax.random.split(key, 3)

    x = jax.random.normal(kx, (N, d), dtype=jnp.float32)
    # nn.Linear weight layouts: A.weight (hidden, d), B.weight (d, hidden).
    a_weight = jax.random.normal(ka, (hidden, d), dtype=jnp.float32) / math.sqrt(d)
    b_weight = jax.random.normal(kb, (d, hidden), dtype=jnp.float32) / math.sqrt(hidden)

    # Transpose ONCE at parameter-load time (not per forward call).
    wa = jnp.asarray(a_weight.T)     # (d, hidden)
    wb = jnp.asarray(b_weight.T)     # (hidden, d)

    # tm/th chosen here to exercise the 2x2 grid and the hidden-axis accumulator.
    y = mlp_forward(x, wa, wb, tm=128, th=128)
    jax.block_until_ready(y)

    # Pure-JAX reference (exact erf GELU), matching the PyTorch module.
    h_ref = x @ a_weight.T
    h_ref = 0.5 * h_ref * (1.0 + jax.lax.erf(h_ref / jnp.sqrt(2.0)))
    y_ref = h_ref @ b_weight.T
    assert jnp.allclose(y, y_ref, atol=1e-4, rtol=1e-4), "mismatch vs reference"

    print("KERNEL_OK")
</pallas_src>

<mosaic_0001>
module attributes {stable_mosaic.version = 11 : i64} {
  func.func @mlp_kernel(%arg0: i32, %arg1: i32, %arg2: memref<128x128xf32, #tpu.memory_space<vmem>>, %arg3: memref<128x128xf32, #tpu.memory_space<vmem>>, %arg4: memref<128x128xf32, #tpu.memory_space<vmem>>, %arg5: memref<128x128xf32, #tpu.memory_space<vmem>>, %arg6: memref<128x128xf32, #tpu.memory_space<vmem>>) attributes {dimension_semantics = [#tpu.dimension_semantics<parallel>, #tpu.dimension_semantics<arbitrary>], iteration_bounds = array<i64: 2, 2>, scalar_prefetch = 0 : i64, scratch_operands = 1 : i64, tpu.core_type = #tpu.core_type<tc>, window_params = [{transform_indices = @transform_0, window_bounds = array<i64: 128, 128>}, {transform_indices = @transform_1, window_bounds = array<i64: 128, 128>}, {transform_indices = @transform_2, window_bounds = array<i64: 128, 128>}, {transform_indices = @transform_3, window_bounds = array<i64: 128, 128>}]} {
    %c0_i32 = arith.constant 0 : i32
    %0 = arith.cmpi eq, %arg1, %c0_i32 : i32
    %1 = arith.extui %0 : i1 to i32
    %c0_i32_0 = arith.constant 0 : i32
    %2 = arith.cmpi ne, %1, %c0_i32_0 : i32
    scf.if %2 {
      %cst_15 = arith.constant 0.000000e+00 : f32
      %22 = vector.broadcast %cst_15 : f32 to vector<128x128xf32>
      %c0_16 = arith.constant 0 : index
      %c0_17 = arith.constant 0 : index
      %23 = vector.load %arg6[%c0_16, %c0_17] : memref<128x128xf32, #tpu.memory_space<vmem>>, vector<128x128xf32>
      tpu.vector_store %arg6[%c0_16, %c0_17], %22 {strides = array<i32>} : memref<128x128xf32, #tpu.memory_space<vmem>>, vector<128x128xf32>,
    } else {
    }
    %c0 = arith.constant 0 : index
    %c0_1 = arith.constant 0 : index
    %3 = vector.load %arg2[%c0, %c0_1] : memref<128x128xf32, #tpu.memory_space<vmem>>, vector<128x128xf32>
    %c0_2 = arith.constant 0 : index
    %c0_3 = arith.constant 0 : index
    %4 = vector.load %arg3[%c0_2, %c0_3] : memref<128x128xf32, #tpu.memory_space<vmem>>, vector<128x128xf32>
    %cst = arith.constant dense<0.000000e+00> : vector<128x128xf32>
    %5 = tpu.matmul %3, %4, %cst {dimension_numbers = #tpu.dot_dimension_numbers<[1], [0], [0], [1], [0, 0, 1, 1], [], []>} : vector<128x128xf32>, vector<128x128xf32>, vector<128x128xf32> -> vector<128x128xf32>
    %cst_4 = arith.constant 5.000000e-01 : f32
    %6 = vector.broadcast %cst_4 : f32 to vector<128x128xf32>
    %7 = arith.mulf %6, %5 : vector<128x128xf32>
    %cst_5 = arith.constant 0.707106769 : f32
    %8 = vector.broadcast %cst_5 : f32 to vector<128x128xf32>
    %9 = arith.mulf %5, %8 : vector<128x128xf32>
    %10 = math.erf %9 : vector<128x128xf32>
    %cst_6 = arith.constant 1.000000e+00 : f32
    %11 = vector.broadcast %cst_6 : f32 to vector<128x128xf32>
    %12 = arith.addf %11, %10 : vector<128x128xf32>
    %13 = arith.mulf %7, %12 : vector<128x128xf32>
    %c0_7 = arith.constant 0 : index
    %c0_8 = arith.constant 0 : index
    %14 = vector.load %arg6[%c0_7, %c0_8] : memref<128x128xf32, #tpu.memory_space<vmem>>, vector<128x128xf32>
    %c0_9 = arith.constant 0 : index
    %c0_10 = arith.constant 0 : index
    %15 = vector.load %arg4[%c0_9, %c0_10] : memref<128x128xf32, #tpu.memory_space<vmem>>, vector<128x128xf32>
    %cst_11 = arith.constant dense<0.000000e+00> : vector<128x128xf32>
    %16 = tpu.matmul %13, %15, %cst_11 {dimension_numbers = #tpu.dot_dimension_numbers<[1], [0], [0], [1], [0, 0, 1, 1], [], []>} : vector<128x128xf32>, vector<128x128xf32>, vector<128x128xf32> -> vector<128x128xf32>
    %17 = arith.addf %14, %16 : vector<128x128xf32>
    %c0_12 = arith.constant 0 : index
    %c0_13 = arith.constant 0 : index
    %18 = vector.load %arg6[%c0_12, %c0_13] : memref<128x128xf32, #tpu.memory_space<vmem>>, vector<128x128xf32>
    tpu.vector_store %arg6[%c0_12, %c0_13], %17 {strides = array<i32>} : memref<128x128xf32, #tpu.memory_space<vmem>>, vector<128x128xf32>,
    %c1_i32 = arith.constant 1 : i32
    %19 = arith.cmpi eq, %arg1, %c1_i32 : i32
    %20 = arith.extui %19 : i1 to i32
    %c0_i32_14 = arith.constant 0 : i32
    %21 = arith.cmpi ne, %20, %c0_i32_14 : i32
    scf.if %21 {
      %c0_15 = arith.constant 0 : index
      %c0_16 = arith.constant 0 : index
      %22 = vector.load %arg6[%c0_15, %c0_16] : memref<128x128xf32, #tpu.memory_space<vmem>>, vector<128x128xf32>
      %c0_17 = arith.constant 0 : index
      %c0_18 = arith.constant 0 : index
      %23 = vector.load %arg5[%c0_17, %c0_18] : memref<128x128xf32, #tpu.memory_space<vmem>>, vector<128x128xf32>
      tpu.vector_store %arg5[%c0_17, %c0_18], %22 {strides = array<i32>} : memref<128x128xf32, #tpu.memory_space<vmem>>, vector<128x128xf32>,
    } else {
    }
    return
  }
  func.func @transform_0(%arg0: i32, %arg1: i32) -> (i32, i32) {
    %c0_i32 = arith.constant 0 : i32
    %c0_i32_0 = arith.constant 0 : i32
    return %arg0, %c0_i32 : i32, i32
  }
  func.func @transform_1(%arg0: i32, %arg1: i32) -> (i32, i32) {
    %c0_i32 = arith.constant 0 : i32
    %c0_i32_0 = arith.constant 0 : i32
    return %c0_i32, %arg1 : i32, i32
  }
  func.func @transform_2(%arg0: i32, %arg1: i32) -> (i32, i32) {
    %c0_i32 = arith.constant 0 : i32
    %c0_i32_0 = arith.constant 0 : i32
    return %arg1, %c0_i32 : i32, i32
  }
  func.func @transform_3(%arg0: i32, %arg1: i32) -> (i32, i32) {
    %c0_i32 = arith.constant 0 : i32
    %c0_i32_0 = arith.constant 0 : i32
    return %arg0, %c0_i32 : i32, i32
  }
}

</mosaic_0001>

<llo_original>
// kernel: tpu_custom_call.1
$region0: #{tpu_custom_call.1}
  #allocation0 [shape = 'u32[]', space=smem, size = 0x4, offset = 0x4, fixed_abs, tag = 'smem constant byte address 0x4 - core index']
  #allocation1 [shape = 'u32[72,128]{1,0:T(1,128)}', space=vmem, size = 0x9000, scoped, tag = 'internal scratch']
  #allocation2 [shape = 'f32[128,128]{1,0:T(8,128)}', space=vmem, size = 0x10000, scoped, tag = 'scratch operand']
  %s0 = inlined_call_operand.hbm [shape: f32[256,128], index: 0, kind: input, shape index: {}]
  %s1 = inlined_call_operand.hbm [shape: f32[128,256], index: 1, kind: input, shape index: {}]
  %s2 = inlined_call_operand.hbm [shape: f32[256,128], index: 2, kind: input, shape index: {}]
  %s3 = inlined_call_operand.hbm [shape: f32[256,128], index: 3, kind: output, shape index: {}]
  %s4 = sld [smem:[#allocation0]]
  $region65: #{tpu_custom_call.1} parent=0
    _
  %s6 = ssub.s32 1, %s4
  %s7 = scalar_select 0, %s6, %s4
  $region1: #{tpu_custom_call.1} parent=0
    #allocation3 [shape = 'u8[131072]{0}', space=vmem, size = 0x20000, scoped, tag = 'input window, operand 0']
    #allocation4 [shape = 's32[2]{0}', space=sflag, size = 0x8, scoped, tag = 'scoped memory for tpu_custom_call.1']
    #allocation5 [shape = 's32[2]{0}', space=sflag, size = 0x8, scoped, tag = 'scoped memory for tpu_custom_call.1']
    #allocation6 [shape = 'u8[131072]{0}', space=vmem, size = 0x20000, scoped, tag = 'input window, operand 1']
    #allocation7 [shape = 's32[2]{0}', space=sflag, size = 0x8, scoped, tag = 'scoped memory for tpu_custom_call.1']
    #allocation8 [shape = 'u8[131072]{0}', space=vmem, size = 0x20000, scoped, tag = 'input window, operand 2']
    #allocation9 [shape = 'u8[131072]{0}', space=vmem, size = 0x20000, scoped, tag = 'output window, operand 0']
    %8 = vsyncpa [#allocation4], 0
    %s9 = scalar_lea.sflag [#allocation4], 1
    %10 = vsyncpa %s9, 0
    %11 = vsyncpa [#allocation7], 0
    %s12 = scalar_lea.sflag [#allocation7], 1
    %13 = vsyncpa %s12, 0
    %14 = vsyncpa [#allocation5], 0
    %s15 = scalar_lea.sflag [#allocation5], 1
    %16 = vsyncpa %s15, 0
    loop: start=0, step=1, limit=6
    $region2: #{tpu_custom_call.1} parent=1 // loop_pre_header
      _
    $region3: #{tpu_custom_call.1} parent=1 // loop_header
      %s18 = sphi 0, %s22
      %p19 = scmp.ge.s32.totalorder %s18, 6
      %s25 = sphi 0, %s37
      %s26 = sphi 0, %s33
      %s27 = sphi 0, %s25
      %s28 = sphi 0, %s26
      %s29 = sphi 0, %s27
      %s30 = sphi 0, %s28
      %s40 = sphi 0, %s42
      %s43 = sphi 0, %s40
      %s44 = sphi 0, %s43
      %s60 = sphi 0, %s44
      %s66 = sphi 0, %s68
      %s69 = sphi 0, %s66
      %s70 = sphi 0, %s69
      %s86 = sphi 0, %s70
      %s92 = sphi 0, %s94
      %s95 = sphi 0, %s92
      %s96 = sphi 0, %s95
      %s112 = sphi 0, %s96
      %s118 = sphi 0, %s120
      %s121 = sphi 0, %s118
      %s122 = sphi 0, %s121
      %s138 = sphi 0, %s122
    $region4: #{tpu_custom_call.1} parent=1 // loop_header_branch
      %21 = sbr.rel (%p19) target = $region8
    $region5: #{tpu_custom_call.1} parent=1 // loop_body
      %s23 = ssub.s32 %s18, 1
      %s24 = ssub.s32 %s18, 2
      %s31 = sadd.s32 1, %s26
      %p32 = scmp.ge.s32.totalorder %s31, 2
      %s33 = scalar_select %p32, 0, %s31
      %s34 = sadd.s32 1, %s25
      %s35 = scalar_select %p32, %s34, %s25
      %p36 = scmp.ge.s32.totalorder %s35, 2
      %s37 = scalar_select %p36, 0, %s35
      %s38 = ssub.s32 %s25, %s37
      %p39 = scmp.eq.s32.totalorder %s38, 0
      %s41 = sadd.s32 %s40, 1
      %s42 = scalar_select %p39, %s40, %s41
      %p45 = pneg %p39
      %p46 = scmp.eq.s32.totalorder %s18, 3
      %p47 = por %p45, %p46
      %p48 = scmp.ne.s32.totalorder %s40, %s43
      %p49 = scmp.eq.s32.totalorder %s18, 0
      %p50 = por %p48, %p49
      %p51 = scmp.ne.s32.totalorder %s40, %s43
      %p52 = scmp.eq.s32.totalorder %s23, 3
      %p53 = por %p51, %p52
      %p54 = scmp.ne.s32.totalorder %s43, %s44
      %p55 = scmp.eq.s32.totalorder %s23, 0
      %p56 = por %p54, %p55
      %p57 = scmp.ne.s32.totalorder %s43, %s44
      %p58 = scmp.eq.s32.totalorder %s24, 3
      %p59 = por %p57, %p58
      %p61 = scmp.ne.s32.totalorder %s44, %s60
      %p62 = scmp.eq.s32.totalorder %s24, 0
      %p63 = por %p61, %p62
      %s64 = ssub.s32 %s26, %s33
      %p65 = scmp.eq.s32.totalorder %s64, 0
      %s67 = sadd.s32 %s66, 1
      %s68 = scalar_select %p65, %s66, %s67
      %p71 = pneg %p65
      %p72 = scmp.eq.s32.totalorder %s18, 3
      %p73 = por %p71, %p72
      %p74 = scmp.ne.s32.totalorder %s66, %s69
      %p75 = scmp.eq.s32.totalorder %s18, 0
      %p76 = por %p74, %p75
      %p77 = scmp.ne.s32.totalorder %s66, %s69
      %p78 = scmp.eq.s32.totalorder %s23, 3
      %p79 = por %p77, %p78
      %p80 = scmp.ne.s32.totalorder %s69, %s70
      %p81 = scmp.eq.s32.totalorder %s23, 0
      %p82 = por %p80, %p81
      %p83 = scmp.ne.s32.totalorder %s69, %s70
      %p84 = scmp.eq.s32.totalorder %s24, 3
      %p85 = por %p83, %p84
      %p87 = scmp.ne.s32.totalorder %s70, %s86
      %p88 = scmp.eq.s32.totalorder %s24, 0
      %p89 = por %p87, %p88
      %s90 = ssub.s32 %s26, %s33
      %p91 = scmp.eq.s32.totalorder %s90, 0
      %s93 = sadd.s32 %s92, 1
      %s94 = scalar_select %p91, %s92, %s93
      %p97 = pneg %p91
      %p98 = scmp.eq.s32.totalorder %s18, 3
      %p99 = por %p97, %p98
      %p100 = scmp.ne.s32.totalorder %s92, %s95
      %p101 = scmp.eq.s32.totalorder %s18, 0
      %p102 = por %p100, %p101
      %p103 = scmp.ne.s32.totalorder %s92, %s95
      %p104 = scmp.eq.s32.totalorder %s23, 3
      %p105 = por %p103, %p104
      %p106 = scmp.ne.s32.totalorder %s95, %s96
      %p107 = scmp.eq.s32.totalorder %s23, 0
      %p108 = por %p106, %p107
      %p109 = scmp.ne.s32.totalorder %s95, %s96
      %p110 = scmp.eq.s32.totalorder %s24, 3
      %p111 = por %p109, %p110
      %p113 = scmp.ne.s32.totalorder %s96, %s112
      %p114 = scmp.eq.s32.totalorder %s24, 0
      %p115 = por %p113, %p114
      %s116 = ssub.s32 %s25, %s37
      %p117 = scmp.eq.s32.totalorder %s116, 0
      %s119 = sadd.s32 %s118, 1
      %s120 = scalar_select %p117, %s118, %s119
      %p123 = pneg %p117
      %p124 = scmp.eq.s32.totalorder %s18, 3
      %p125 = por %p123, %p124
      %p126 = scmp.ne.s32.totalorder %s118, %s121
      %p127 = scmp.eq.s32.totalorder %s18, 0
      %p128 = por %p126, %p127
      %p129 = scmp.ne.s32.totalorder %s118, %s121
      %p130 = scmp.eq.s32.totalorder %s23, 3
      %p131 = por %p129, %p130
      %p132 = scmp.ne.s32.totalorder %s121, %s122
      %p133 = scmp.eq.s32.totalorder %s23, 0
      %p134 = por %p132, %p133
      %p135 = scmp.ne.s32.totalorder %s121, %s122
      %p136 = scmp.eq.s32.totalorder %s24, 3
      %p137 = por %p135, %p136
      %p139 = scmp.ne.s32.totalorder %s122, %s138
      %p140 = scmp.eq.s32.totalorder %s24, 0
      %p141 = por %p139, %p140
      %p142 = scmp.le.s32.totalorder 1, %s18
      %p143 = scmp.lt.s32.totalorder %s18, 5
      %p144 = pnand %p142, %p143
      %p145 = pneg %p144
      // Predicated region
      $region9: #{tpu_custom_call.1} parent=5 // pred_check
        _
      $region10: #{tpu_custom_call.1} parent=5 // pred_check_branch
        %147 = sbr.rel (%p144) target = $region12
      $region11: #{tpu_custom_call.1} parent=5 // pred_region
        %s148 = ssub.s32 %s18, 1
      $region12: #{tpu_custom_call.1} parent=5 // pred_fallthru
        _
      %p149 = scmp.lt.s32.totalorder %s18, 4
      // Predicated region
      $region13: #{tpu_custom_call.1} parent=5 // pred_check
        %p150 = pneg %p149
      $region14: #{tpu_custom_call.1} parent=5 // pred_check_branch
        %152 = sbr.rel (%p150) target = $region16
      $region15: #{tpu_custom_call.1} parent=5 // pred_region
        // Predicated region
        $region17: #{tpu_custom_call.1} parent=15 // pred_check
          %p153 = pneg %p50
        $region18: #{tpu_custom_call.1} parent=15 // pred_check_branch
          %155 = sbr.rel (%p153) target = $region20
        $region19: #{tpu_custom_call.1} parent=15 // pred_region
          %s156 = sand.u32 %s40, 1
          %s157 = scalar_lea.sflag [#allocation4], %s156
          %s158 = sand.u32 %s40, 1
          %s159 = smul.addr %s158, 128
          %s160 = scalar_lea.vmem [#allocation3], %s159
          %s161 = smul.u32 16, %s25
          %163 = vsyncadd %s157, 0
          %s164 = smul.addr %s161, 8
          %s165 = scalar_lea.hbm %s0, %s164
          %s166 = sshll.u32 %s165, 4
          %s167 = int_to_ptr.hbm [resolvable:$true] %s166
          %s168 = sshll.u32 %s160, 4
          %s169 = int_to_ptr.vmem [resolvable:$true] %s168
          %174 = dma.hbm_to_vmem [thread:$0]  %s167, 2048, %s169, %s157, 128, 128, 8
        $region20: #{tpu_custom_call.1} parent=15 // pred_fallthru
          _
        // Predicated region
        $region21: #{tpu_custom_call.1} parent=15 // pred_check
          %p175 = pneg %p76
        $region22: #{tpu_custom_call.1} parent=15 // pred_check_branch
          %177 = sbr.rel (%p175) target = $region24
        $region23: #{tpu_custom_call.1} parent=15 // pred_region
          %s178 = sand.u32 %s18, 1
          %s179 = scalar_lea.sflag [#allocation7], %s178
          %s180 = sand.u32 %s66, 1
          %s181 = smul.addr %s180, 128
          %s182 = scalar_lea.vmem [#allocation6], %s181
          %184 = vsyncadd %s179, 0
          %s185 = smul.addr %s26, 8
          %s186 = scalar_lea.hbm %s1, %s185
          %s187 = sshll.u32 %s186, 4
          %s188 = int_to_ptr.hbm [resolvable:$true] %s187
          %s189 = sshll.u32 %s182, 4
          %s190 = int_to_ptr.vmem [resolvable:$true] %s189
          %195 = dma.hbm_to_vmem [thread:$0]  %s188, 2048, %s190, %s179, 256, 128, 8
        $region24: #{tpu_custom_call.1} parent=15 // pred_fallthru
          _
        // Predicated region
        $region25: #{tpu_custom_call.1} parent=15 // pred_check
          %p196 = pneg %p102
        $region26: #{tpu_custom_call.1} parent=15 // pred_check_branch
          %198 = sbr.rel (%p196) target = $region28
        $region27: #{tpu_custom_call.1} parent=15 // pred_region
          %s199 = sand.u32 %s18, 1
          %s200 = scalar_lea.sflag [#allocation7], %s199
          %s201 = sand.u32 %s92, 1
          %s202 = smul.addr %s201, 128
          %s203 = scalar_lea.vmem [#allocation8], %s202
          %s204 = smul.u32 16, %s26
          %206 = vsyncadd %s200, 0
          %s207 = smul.addr %s204, 8
          %s208 = scalar_lea.hbm %s2, %s207
          %s209 = sshll.u32 %s208, 4
          %s210 = int_to_ptr.hbm [resolvable:$true] %s209
          %s211 = sshll.u32 %s203, 4
          %s212 = int_to_ptr.vmem [resolvable:$true] %s211
          %217 = dma.hbm_to_vmem [thread:$0]  %s210, 2048, %s212, %s200, 128, 128, 8
        $region28: #{tpu_custom_call.1} parent=15 // pred_fallthru
          _
      $region16: #{tpu_custom_call.1} parent=5 // pred_fallthru
        _
      %p218 = scmp.le.s32.totalorder 1, %s18
      %p219 = scmp.lt.s32.totalorder %s18, 5
      %p220 = pnand %p218, %p219
      %p221 = pneg %p220
      // Predicated region
      $region29: #{tpu_custom_call.1} parent=5 // pred_check
        _
      $region30: #{tpu_custom_call.1} parent=5 // pred_check_branch
        %223 = sbr.rel (%p220) target = $region32
      $region31: #{tpu_custom_call.1} parent=5 // pred_region
        %s224 = ssub.s32 %s18, 1
        %s225 = sand.u32 %s43, 1
        %s226 = scalar_lea.sflag [#allocation4], %s225
        %s227 = sand.u32 %s43, 1
        %s228 = smul.addr %s227, 128
        %s229 = scalar_lea.vmem [#allocation3], %s228
        // Predicated region
        $region33: #{tpu_custom_call.1} parent=31 // pred_check
          %p230 = pneg %p56
        $region34: #{tpu_custom_call.1} parent=31 // pred_check_branch
          %232 = sbr.rel (%p230) target = $region36
        $region35: #{tpu_custom_call.1} parent=31 // pred_region
          %234 = dma.done %s226, 2048
        $region36: #{tpu_custom_call.1} parent=31 // pred_fallthru
          _
        %s235 = sand.u32 %s23, 1
        %s236 = scalar_lea.sflag [#allocation7], %s235
        %s237 = sand.u32 %s69, 1
        %s238 = smul.addr %s237, 128
        %s239 = scalar_lea.vmem [#allocation6], %s238
        // Predicated region
        $region37: #{tpu_custom_call.1} parent=31 // pred_check
          %p240 = pneg %p82
        $region38: #{tpu_custom_call.1} parent=31 // pred_check_branch
          %242 = sbr.rel (%p240) target = $region40
        $region39: #{tpu_custom_call.1} parent=31 // pred_region
          %244 = dma.done %s236, 2048
        $region40: #{tpu_custom_call.1} parent=31 // pred_fallthru
          _
        %s245 = sand.u32 %s23, 1
        %s246 = scalar_lea.sflag [#allocation7], %s245
        %s247 = sand.u32 %s95, 1
        %s248 = smul.addr %s247, 128
        %s249 = scalar_lea.vmem [#allocation8], %s248
        // Predicated region
        $region41: #{tpu_custom_call.1} parent=31 // pred_check
          %p250 = pneg %p108
        $region42: #{tpu_custom_call.1} parent=31 // pred_check_branch
          %252 = sbr.rel (%p250) target = $region44
        $region43: #{tpu_custom_call.1} parent=31 // pred_region
          %254 = dma.done %s246, 2048
        $region44: #{tpu_custom_call.1} parent=31 // pred_fallthru
          _
        %s255 = sand.u32 %s43, 1
        %s256 = scalar_lea.sflag [#allocation4], %s255
        %s257 = sand.u32 %s43, 1
        %s258 = smul.addr %s257, 128
        %s259 = scalar_lea.vmem [#allocation3], %s258
        %p260 = pneg %p56
        %p261 = pneg %p53
        %s262 = sand.u32 %s23, 1
        %s263 = scalar_lea.sflag [#allocation7], %s262
        %s264 = sand.u32 %s69, 1
        %s265 = smul.addr %s264, 128
        %s266 = scalar_lea.vmem [#allocation6], %s265
        %p267 = pneg %p82
        %p268 = pneg %p79
        %s269 = sand.u32 %s23, 1
        %s270 = scalar_lea.sflag [#allocation7], %s269
        %s271 = sand.u32 %s95, 1
        %s272 = smul.addr %s271, 128
        %s273 = scalar_lea.vmem [#allocation8], %s272
        %p274 = pneg %p108
        %p275 = pneg %p105
        %p276 = pneg %p134
        %p277 = pneg %p131
        %s278 = sand.u32 %s121, 1
        %s279 = scalar_lea.sflag [#allocation5], %s278
        %s280 = sand.u32 %s121, 1
        %s281 = smul.addr %s280, 128
        %s282 = scalar_lea.vmem [#allocation9], %s281
        %s283 = smul.u32 16, %s27
        %s284 = smul.u32 16, %s28
        %s285 = smul.u32 16, %s27
        %p286 = scmp.eq.s32.totalorder %s28, 0
        // Predicated region
        $region45: #{tpu_custom_call.1} parent=31 // pred_check
          %p287 = pneg %p286
        $region46: #{tpu_custom_call.1} parent=31 // pred_check_branch
          %289 = sbr.rel (%p287) target = $region48
        $region47: #{tpu_custom_call.1} parent=31 // pred_region
          %290 = vst [vmem:[#allocation2] sm:$0xff] 0.0
          %291 = vst [vmem:[#allocation2 + $0x8] sm:$0xff] 0.0
          %292 = vst [vmem:[#allocation2 + $0x10] sm:$0xff] 0.0
          %293 = vst [vmem:[#allocation2 + $0x18] sm:$0xff] 0.0
          %294 = vst [vmem:[#allocation2 + $0x20] sm:$0xff] 0.0
          %295 = vst [vmem:[#allocation2 + $0x28] sm:$0xff] 0.0
          %296 = vst [vmem:[#allocation2 + $0x30] sm:$0xff] 0.0
          %297 = vst [vmem:[#allocation2 + $0x38] sm:$0xff] 0.0
          %298 = vst [vmem:[#allocation2 + $0x40] sm:$0xff] 0.0
          %299 = vst [vmem:[#allocation2 + $0x48] sm:$0xff] 0.0
          %300 = vst [vmem:[#allocation2 + $0x50] sm:$0xff] 0.0
          %301 = vst [vmem:[#allocation2 + $0x58] sm:$0xff] 0.0
          %302 = vst [vmem:[#allocation2 + $0x60] sm:$0xff] 0.0
          %303 = vst [vmem:[#allocation2 + $0x68] sm:$0xff] 0.0
          %304 = vst [vmem:[#allocation2 + $0x70] sm:$0xff] 0.0
          %305 = vst [vmem:[#allocation2 + $0x78] sm:$0xff] 0.0
        $region48: #{tpu_custom_call.1} parent=31 // pred_fallthru
          _
        %v306 = vld [vmem:[%s229] sm:$0xff]
        %v307 = vld [vmem:[%s229 + $0x8] sm:$0xff]
        %v308 = vld [vmem:[%s229 + $0x10] sm:$0xff]
        %v309 = vld [vmem:[%s229 + $0x18] sm:$0xff]
        %v310 = vld [vmem:[%s229 + $0x20] sm:$0xff]
        %v311 = vld [vmem:[%s229 + $0x28] sm:$0xff]
        %v312 = vld [vmem:[%s229 + $0x30] sm:$0xff]
        %v313 = vld [vmem:[%s229 + $0x38] sm:$0xff]
        %v314 = vld [vmem:[%s229 + $0x40] sm:$0xff]
        %v315 = vld [vmem:[%s229 + $0x48] sm:$0xff]
        %v316 = vld [vmem:[%s229 + $0x50] sm:$0xff]
        %v317 = vld [vmem:[%s229 + $0x58] sm:$0xff]
        %v318 = vld [vmem:[%s229 + $0x60] sm:$0xff]
        %v319 = vld [vmem:[%s229 + $0x68] sm:$0xff]
        %v320 = vld [vmem:[%s229 + $0x70] sm:$0xff]
        %v321 = vld [vmem:[%s229 + $0x78] sm:$0xff]
        %v322 = vld [vmem:[%s239] sm:$0xff]
        %v323 = vld [vmem:[%s239 + $0x8] sm:$0xff]
        %v324 = vld [vmem:[%s239 + $0x10] sm:$0xff]
        %v325 = vld [vmem:[%s239 + $0x18] sm:$0xff]
        %v326 = vld [vmem:[%s239 + $0x20] sm:$0xff]
        %v327 = vld [vmem:[%s239 + $0x28] sm:$0xff]
        %v328 = vld [vmem:[%s239 + $0x30] sm:$0xff]
        %v329 = vld [vmem:[%s239 + $0x38] sm:$0xff]
        %v330 = vld [vmem:[%s239 + $0x40] sm:$0xff]
        %v331 = vld [vmem:[%s239 + $0x48] sm:$0xff]
        %v332 = vld [vmem:[%s239 + $0x50] sm:$0xff]
        %v333 = vld [vmem:[%s239 + $0x58] sm:$0xff]
        %v334 = vld [vmem:[%s239 + $0x60] sm:$0xff]
        %v335 = vld [vmem:[%s239 + $0x68] sm:$0xff]
        %v336 = vld [vmem:[%s239 + $0x70] sm:$0xff]
        %v337 = vld [vmem:[%s239 + $0x78] sm:$0xff]
        %338 = vmatpush.msra.mxu0 %v337
        %339 = vmatpush.msra.mxu0 %v336
        %340 = vmatpush.msra.mxu0 %v335
        %341 = vmatpush.msra.mxu0 %v334
        %342 = vmatpush.msra.mxu0 %v333
        %343 = vmatpush.msra.mxu0 %v332
        %344 = vmatpush.msra.mxu0 %v331
        %345 = vmatpush.msra.mxu0 %v330
        %346 = vmatpush.msra.mxu0 %v329
        %347 = vmatpush.msra.mxu0 %v328
        %348 = vmatpush.msra.mxu0 %v327
        %349 = vmatpush.msra.mxu0 %v326
        %350 = vmatpush.msra.mxu0 %v325
        %351 = vmatpush.msra.mxu0 %v324
        %352 = vmatpush.msra.mxu0 %v323
        %353 = vmatpush.msra.mxu0 %v322
        %354 = vmatmul.f32.gmra.mxu0 %v306
        %v355 = vpop.f32.mrf.mxu0
        %v356 = vadd.f32 0.0, %v355
        %357 = vmatmul.f32.gmra.mxu0 %v307
        %v358 = vpop.f32.mrf.mxu0
        %v359 = vadd.f32 0.0, %v358
        %360 = vmatmul.f32.gmra.mxu0 %v308
        %v361 = vpop.f32.mrf.mxu0
        %v362 = vadd.f32 0.0, %v361
        %363 = vmatmul.f32.gmra.mxu0 %v309
        %v364 = vpop.f32.mrf.mxu0
        %v365 = vadd.f32 0.0, %v364
        %366 = vmatmul.f32.gmra.mxu0 %v310
        %v367 = vpop.f32.mrf.mxu0
        %v368 = vadd.f32 0.0, %v367
        %369 = vmatmul.f32.gmra.mxu0 %v311
        %v370 = vpop.f32.mrf.mxu0
        %v371 = vadd.f32 0.0, %v370
        %372 = vmatmul.f32.gmra.mxu0 %v312
        %v373 = vpop.f32.mrf.mxu0
        %v374 = vadd.f32 0.0, %v373
        %375 = vmatmul.f32.gmra.mxu0 %v313
        %v376 = vpop.f32.mrf.mxu0
        %v377 = vadd.f32 0.0, %v376
        %378 = vmatmul.f32.gmra.mxu0 %v314
        %v379 = vpop.f32.mrf.mxu0
        %v380 = vadd.f32 0.0, %v379
        %381 = vmatmul.f32.gmra.mxu0 %v315
        %v382 = vpop.f32.mrf.mxu0
        %v383 = vadd.f32 0.0, %v382
        %384 = vmatmul.f32.gmra.mxu0 %v316
        %v385 = vpop.f32.mrf.mxu0
        %v386 = vadd.f32 0.0, %v385
        %387 = vmatmul.f32.gmra.mxu0 %v317
        %v388 = vpop.f32.mrf.mxu0
        %v389 = vadd.f32 0.0, %v388
        %390 = vmatmul.f32.gmra.mxu0 %v318
        %v391 = vpop.f32.mrf.mxu0
        %v392 = vadd.f32 0.0, %v391
        %393 = vmatmul.f32.gmra.mxu0 %v319
        %v394 = vpop.f32.mrf.mxu0
        %v395 = vadd.f32 0.0, %v394
        %396 = vmatmul.f32.gmra.mxu0 %v320
        %v397 = vpop.f32.mrf.mxu0
        %v398 = vadd.f32 0.0, %v397
        %399 = vmatmul.f32.gmra.mxu0 %v321
        %v400 = vpop.f32.mrf.mxu0
        %v401 = vadd.f32 0.0, %v400
        %402 = vdwg.mxu0
        %v403 = vmul.f32 %v356, 0.5
        %v404 = vmul.f32 %v359, 0.5
        %v405 = vmul.f32 %v362, 0.5
        %v406 = vmul.f32 %v365, 0.5
        %v407 = vmul.f32 %v368, 0.5
        %v408 = vmul.f32 %v371, 0.5
        %v409 = vmul.f32 %v374, 0.5
        %v410 = vmul.f32 %v377, 0.5
        %v411 = vmul.f32 %v380, 0.5
        %v412 = vmul.f32 %v383, 0.5
        %v413 = vmul.f32 %v386, 0.5
        %v414 = vmul.f32 %v389, 0.5
        %v415 = vmul.f32 %v392, 0.5
        %v416 = vmul.f32 %v395, 0.5
        %v417 = vmul.f32 %v398, 0.5
        %v418 = vmul.f32 %v401, 0.5
        %v419 = vmul.f32 %v356, 0.70710677
        %v420 = vmul.f32 %v359, 0.70710677
        %v421 = vmul.f32 %v362, 0.70710677
        %v422 = vmul.f32 %v365, 0.70710677
        %v423 = vmul.f32 %v368, 0.70710677
        %v424 = vmul.f32 %v371, 0.70710677
        %v425 = vmul.f32 %v374, 0.70710677
        %v426 = vmul.f32 %v377, 0.70710677
        %v427 = vmul.f32 %v380, 0.70710677
        %v428 = vmul.f32 %v383, 0.70710677
        %v429 = vmul.f32 %v386, 0.70710677
        %v430 = vmul.f32 %v389, 0.70710677
        %v431 = vmul.f32 %v392, 0.70710677
        %v432 = vmul.f32 %v395, 0.70710677
        %v433 = vmul.f32 %v398, 0.70710677
        %v434 = vmul.f32 %v401, 0.70710677
        %v435 = vmul.f32 %v419, %v419
        %v436 = vmin.f32 16.0, %v435
        %v437 = vmul.f32 %v436, 2.1237322e-06
        %v438 = vadd.f32 %v437, 0.00028619796
        %v439 = vmul.f32 %v436, %v438
        %v440 = vadd.f32 %v439, 0.0036580483
        %v441 = vmul.f32 %v436, %v440
        %v442 = vadd.f32 %v441, 0.05243302
        %v443 = vmul.f32 %v436, %v442
        %v444 = vadd.f32 %v443, 0.18741608
        %v445 = vmul.f32 %v436, %v444
        %v446 = vadd.f32 %v445, 1.1283791
        %v447 = vmul.f32 %v419, %v446
        %v448 = vmul.f32 %v436, 3.8918573e-05
        %v449 = vadd.f32 %v448, 0.001143296
        %v450 = vmul.f32 %v436, %v449
        %v451 = vadd.f32 %v450, 0.014752088
        %v452 = vmul.f32 %v436, %v451
        %v453 = vadd.f32 %v452, 0.112945676
        %v454 = vmul.f32 %v436, %v453
        %v455 = vadd.f32 %v454, 0.4994258
        %v456 = vmul.f32 %v436, %v455
        %v457 = vadd.f32 %v456, 1.0
        %v458 = vrcp.pop %v457
        %v459 = vmul.f32 %v457, %v458
        %v460 = vsub.f32 1.0, %v459
        %v461 = vmul.f32 %v458, %v460
        %v462 = vadd.f32 %v458, %v461
        %vm463 = vweird.f32 %v457
        %vm464 = vweird.f32 %v458
        %vm465 = vmor %vm463, %vm464
        %v466 = vsel %vm465, %v458, %v462
        %v467 = vand.u32 2147483647, %v457
        %vm468 = vcmp.eq.f32.partialorder %v467, 8.507059e+37
        %v469 = vand.u32 %v457, 2147483648
        %v470 = vor.u32 1.1754944e-38, %v469
        %v471 = vsel %vm468, %v470, %v466
        %v472 = vmul.f32 %v447, %v471
        %v473 = vmin.f32 %v472, 1.0
        %v474 = vmax.f32 %v473, -1.0
        %v475 = vmul.f32 %v420, %v420
        %v476 = vmin.f32 16.0, %v475
        %v477 = vmul.f32 %v476, 2.1237322e-06
        %v478 = vadd.f32 %v477, 0.00028619796
        %v479 = vmul.f32 %v476, %v478
        %v480 = vadd.f32 %v479, 0.0036580483
        %v481 = vmul.f32 %v476, %v480
        %v482 = vadd.f32 %v481, 0.05243302
        %v483 = vmul.f32 %v476, %v482
        %v484 = vadd.f32 %v483, 0.18741608
        %v485 = vmul.f32 %v476, %v484
        %v486 = vadd.f32 %v485, 1.1283791
        %v487 = vmul.f32 %v420, %v486
        %v488 = vmul.f32 %v476, 3.8918573e-05
        %v489 = vadd.f32 %v488, 0.001143296
        %v490 = vmul.f32 %v476, %v489
        %v491 = vadd.f32 %v490, 0.014752088
        %v492 = vmul.f32 %v476, %v491
        %v493 = vadd.f32 %v492, 0.112945676
        %v494 = vmul.f32 %v476, %v493
        %v495 = vadd.f32 %v494, 0.4994258
        %v496 = vmul.f32 %v476, %v495
        %v497 = vadd.f32 %v496, 1.0
        %v498 = vrcp.pop %v497
        %v499 = vmul.f32 %v497, %v498
        %v500 = vsub.f32 1.0, %v499
        %v501 = vmul.f32 %v498, %v500
        %v502 = vadd.f32 %v498, %v501
        %vm503 = vweird.f32 %v497
        %vm504 = vweird.f32 %v498
        %vm505 = vmor %vm503, %vm504
        %v506 = vsel %vm505, %v498, %v502
        %v507 = vand.u32 2147483647, %v497
        %vm508 = vcmp.eq.f32.partialorder %v507, 8.507059e+37
        %v509 = vand.u32 %v497, 2147483648
        %v510 = vor.u32 1.1754944e-38, %v509
        %v511 = vsel %vm508, %v510, %v506
        %v512 = vmul.f32 %v487, %v511
        %v513 = vmin.f32 %v512, 1.0
        %v514 = vmax.f32 %v513, -1.0
        %v515 = vmul.f32 %v421, %v421
        %v516 = vmin.f32 16.0, %v515
        %v517 = vmul.f32 %v516, 2.1237322e-06
        %v518 = vadd.f32 %v517, 0.00028619796
        %v519 = vmul.f32 %v516, %v518
        %v520 = vadd.f32 %v519, 0.0036580483
        %v521 = vmul.f32 %v516, %v520
        %v522 = vadd.f32 %v521, 0.05243302
        %v523 = vmul.f32 %v516, %v522
        %v524 = vadd.f32 %v523, 0.18741608
        %v525 = vmul.f32 %v516, %v524
        %v526 = vadd.f32 %v525, 1.1283791
        %v527 = vmul.f32 %v421, %v526
        %v528 = vmul.f32 %v516, 3.8918573e-05
        %v529 = vadd.f32 %v528, 0.001143296
        %v530 = vmul.f32 %v516, %v529
        %v531 = vadd.f32 %v530, 0.014752088
        %v532 = vmul.f32 %v516, %v531
        %v533 = vadd.f32 %v532, 0.112945676
        %v534 = vmul.f32 %v516, %v533
        %v535 = vadd.f32 %v534, 0.4994258
        %v536 = vmul.f32 %v516, %v535
        %v537 = vadd.f32 %v536, 1.0
        %v538 = vrcp.pop %v537
        %v539 = vmul.f32 %v537, %v538
        %v540 = vsub.f32 1.0, %v539
        %v541 = vmul.f32 %v538, %v540
        %v542 = vadd.f32 %v538, %v541
        %vm543 = vweird.f32 %v537
        %vm544 = vweird.f32 %v538
        %vm545 = vmor %vm543, %vm544
        %v546 = vsel %vm545, %v538, %v542
        %v547 = vand.u32 2147483647, %v537
        %vm548 = vcmp.eq.f32.partialorder %v547, 8.507059e+37
        %v549 = vand.u32 %v537, 2147483648
        %v550 = vor.u32 1.1754944e-38, %v549
        %v551 = vsel %vm548, %v550, %v546
        %v552 = vmul.f32 %v527, %v551
        %v553 = vmin.f32 %v552, 1.0
        %v554 = vmax.f32 %v553, -1.0
        %v555 = vmul.f32 %v422, %v422
        %v556 = vmin.f32 16.0, %v555
        %v557 = vmul.f32 %v556, 2.1237322e-06
        %v558 = vadd.f32 %v557, 0.00028619796
        %v559 = vmul.f32 %v556, %v558
        %v560 = vadd.f32 %v559, 0.0036580483
        %v561 = vmul.f32 %v556, %v560
        %v562 = vadd.f32 %v561, 0.05243302
        %v563 = vmul.f32 %v556, %v562
        %v564 = vadd.f32 %v563, 0.18741608
        %v565 = vmul.f32 %v556, %v564
        %v566 = vadd.f32 %v565, 1.1283791
        %v567 = vmul.f32 %v422, %v566
        %v568 = vmul.f32 %v556, 3.8918573e-05
        %v569 = vadd.f32 %v568, 0.001143296
        %v570 = vmul.f32 %v556, %v569
        %v571 = vadd.f32 %v570, 0.014752088
        %v572 = vmul.f32 %v556, %v571
        %v573 = vadd.f32 %v572, 0.112945676
        %v574 = vmul.f32 %v556, %v573
        %v575 = vadd.f32 %v574, 0.4994258
        %v576 = vmul.f32 %v556, %v575
        %v577 = vadd.f32 %v576, 1.0
        %v578 = vrcp.pop %v577
        %v579 = vmul.f32 %v577, %v578
        %v580 = vsub.f32 1.0, %v579
        %v581 = vmul.f32 %v578, %v580
        %v582 = vadd.f32 %v578, %v581
        %vm583 = vweird.f32 %v577
        %vm584 = vweird.f32 %v578
        %vm585 = vmor %vm583, %vm584
        %v586 = vsel %vm585, %v578, %v582
        %v587 = vand.u32 2147483647, %v577
        %vm588 = vcmp.eq.f32.partialorder %v587, 8.507059e+37
        %v589 = vand.u32 %v577, 2147483648
        %v590 = vor.u32 1.1754944e-38, %v589
        %v591 = vsel %vm588, %v590, %v586
        %v592 = vmul.f32 %v567, %v591
        %v593 = vmin.f32 %v592, 1.0
        %v594 = vmax.f32 %v593, -1.0
        %v595 = vmul.f32 %v423, %v423
        %v596 = vmin.f32 16.0, %v595
        %v597 = vmul.f32 %v596, 2.1237322e-06
        %v598 = vadd.f32 %v597, 0.00028619796
        %v599 = vmul.f32 %v596, %v598
        %v600 = vadd.f32 %v599, 0.0036580483
        %v601 = vmul.f32 %v596, %v600
        %v602 = vadd.f32 %v601, 0.05243302
        %v603 = vmul.f32 %v596, %v602
        %v604 = vadd.f32 %v603, 0.18741608
        %v605 = vmul.f32 %v596, %v604
        %v606 = vadd.f32 %v605, 1.1283791
        %v607 = vmul.f32 %v423, %v606
        %v608 = vmul.f32 %v596, 3.8918573e-05
        %v609 = vadd.f32 %v608, 0.001143296
        %v610 = vmul.f32 %v596, %v609
        %v611 = vadd.f32 %v610, 0.014752088
        %v612 = vmul.f32 %v596, %v611
        %v613 = vadd.f32 %v612, 0.112945676
        %v614 = vmul.f32 %v596, %v613
        %v615 = vadd.f32 %v614, 0.4994258
        %v616 = vmul.f32 %v596, %v615
        %v617 = vadd.f32 %v616, 1.0
        %v618 = vrcp.pop %v617
        %v619 = vmul.f32 %v617, %v618
        %v620 = vsub.f32 1.0, %v619
        %v621 = vmul.f32 %v618, %v620
        %v622 = vadd.f32 %v618, %v621
        %vm623 = vweird.f32 %v617
        %vm624 = vweird.f32 %v618
        %vm625 = vmor %vm623, %vm624
        %v626 = vsel %vm625, %v618, %v622
        %v627 = vand.u32 2147483647, %v617
        %vm628 = vcmp.eq.f32.partialorder %v627, 8.507059e+37
        %v629 = vand.u32 %v617, 2147483648
        %v630 = vor.u32 1.1754944e-38, %v629
        %v631 = vsel %vm628, %v630, %v626
        %v632 = vmul.f32 %v607, %v631
        %v633 = vmin.f32 %v632, 1.0
        %v634 = vmax.f32 %v633, -1.0
        %v635 = vmul.f32 %v424, %v424
        %v636 = vmin.f32 16.0, %v635
        %v637 = vmul.f32 %v636, 2.1237322e-06
        %v638 = vadd.f32 %v637, 0.00028619796
        %v639 = vmul.f32 %v636, %v638
        %v640 = vadd.f32 %v639, 0.0036580483
        %v641 = vmul.f32 %v636, %v640
        %v642 = vadd.f32 %v641, 0.05243302
        %v643 = vmul.f32 %v636, %v642
        %v644 = vadd.f32 %v643, 0.18741608
        %v645 = vmul.f32 %v636, %v644
        %v646 = vadd.f32 %v645, 1.1283791
        %v647 = vmul.f32 %v424, %v646
        %v648 = vmul.f32 %v636, 3.8918573e-05
        %v649 = vadd.f32 %v648, 0.001143296
        %v650 = vmul.f32 %v636, %v649
        %v651 = vadd.f32 %v650, 0.014752088
        %v652 = vmul.f32 %v636, %v651
        %v653 = vadd.f32 %v652, 0.112945676
        %v654 = vmul.f32 %v636, %v653
        %v655 = vadd.f32 %v654, 0.4994258
        %v656 = vmul.f32 %v636, %v655
        %v657 = vadd.f32 %v656, 1.0
        %v658 = vrcp.pop %v657
        %v659 = vmul.f32 %v657, %v658
        %v660 = vsub.f32 1.0, %v659
        %v661 = vmul.f32 %v658, %v660
        %v662 = vadd.f32 %v658, %v661
        %vm663 = vweird.f32 %v657
        %vm664 = vweird.f32 %v658
        %vm665 = vmor %vm663, %vm664
        %v666 = vsel %vm665, %v658, %v662
        %v667 = vand.u32 2147483647, %v657
        %vm668 = vcmp.eq.f32.partialorder %v667, 8.507059e+37
        %v669 = vand.u32 %v657, 2147483648
        %v670 = vor.u32 1.1754944e-38, %v669
        %v671 = vsel %vm668, %v670, %v666
        %v672 = vmul.f32 %v647, %v671
        %v673 = vmin.f32 %v672, 1.0
        %v674 = vmax.f32 %v673, -1.0
        %v675 = vmul.f32 %v425, %v425
        %v676 = vmin.f32 16.0, %v675
        %v677 = vmul.f32 %v676, 2.1237322e-06
        %v678 = vadd.f32 %v677, 0.00028619796
        %v679 = vmul.f32 %v676, %v678
        %v680 = vadd.f32 %v679, 0.0036580483
        %v681 = vmul.f32 %v676, %v680
        %v682 = vadd.f32 %v681, 0.05243302
        %v683 = vmul.f32 %v676, %v682
        %v684 = vadd.f32 %v683, 0.18741608
        %v685 = vmul.f32 %v676, %v684
        %v686 = vadd.f32 %v685, 1.1283791
        %v687 = vmul.f32 %v425, %v686
        %v688 = vmul.f32 %v676, 3.8918573e-05
        %v689 = vadd.f32 %v688, 0.001143296
        %v690 = vmul.f32 %v676, %v689
        %v691 = vadd.f32 %v690, 0.014752088
        %v692 = vmul.f32 %v676, %v691
        %v693 = vadd.f32 %v692, 0.112945676
        %v694 = vmul.f32 %v676, %v693
        %v695 = vadd.f32 %v694, 0.4994258
        %v696 = vmul.f32 %v676, %v695
        %v697 = vadd.f32 %v696, 1.0
        %v698 = vrcp.pop %v697
        %v699 = vmul.f32 %v697, %v698
        %v700 = vsub.f32 1.0, %v699
        %v701 = vmul.f32 %v698, %v700
        %v702 = vadd.f32 %v698, %v701
        %vm703 = vweird.f32 %v697
        %vm704 = vweird.f32 %v698
        %vm705 = vmor %vm703, %vm704
        %v706 = vsel %vm705, %v698, %v702
        %v707 = vand.u32 2147483647, %v697
        %vm708 = vcmp.eq.f32.partialorder %v707, 8.507059e+37
        %v709 = vand.u32 %v697, 2147483648
        %v710 = vor.u32 1.1754944e-38, %v709
        %v711 = vsel %vm708, %v710, %v706
        %v712 = vmul.f32 %v687, %v711
        %v713 = vmin.f32 %v712, 1.0
        %v714 = vmax.f32 %v713, -1.0
        %v715 = vmul.f32 %v426, %v426
        %v716 = vmin.f32 16.0, %v715
        %v717 = vmul.f32 %v716, 2.1237322e-06
        %v718 = vadd.f32 %v717, 0.00028619796
        %v719 = vmul.f32 %v716, %v718
        %v720 = vadd.f32 %v719, 0.0036580483
        %v721 = vmul.f32 %v716, %v720
        %v722 = vadd.f32 %v721, 0.05243302
        %v723 = vmul.f32 %v716, %v722
        %v724 = vadd.f32 %v723, 0.18741608
        %v725 = vmul.f32 %v716, %v724
        %v726 = vadd.f32 %v725, 1.1283791
        %v727 = vmul.f32 %v426, %v726
        %v728 = vmul.f32 %v716, 3.8918573e-05
        %v729 = vadd.f32 %v728, 0.001143296
        %v730 = vmul.f32 %v716, %v729
        %v731 = vadd.f32 %v730, 0.014752088
        %v732 = vmul.f32 %v716, %v731
        %v733 = vadd.f32 %v732, 0.112945676
        %v734 = vmul.f32 %v716, %v733
        %v735 = vadd.f32 %v734, 0.4994258
        %v736 = vmul.f32 %v716, %v735
        %v737 = vadd.f32 %v736, 1.0
        %v738 = vrcp.pop %v737
        %v739 = vmul.f32 %v737, %v738
        %v740 = vsub.f32 1.0, %v739
        %v741 = vmul.f32 %v738, %v740
        %v742 = vadd.f32 %v738, %v741
        %vm743 = vweird.f32 %v737
        %vm744 = vweird.f32 %v738
        %vm745 = vmor %vm743, %vm744
        %v746 = vsel %vm745, %v738, %v742
        %v747 = vand.u32 2147483647, %v737
        %vm748 = vcmp.eq.f32.partialorder %v747, 8.507059e+37
        %v749 = vand.u32 %v737, 2147483648
        %v750 = vor.u32 1.1754944e-38, %v749
        %v751 = vsel %vm748, %v750, %v746
        %v752 = vmul.f32 %v727, %v751
        %v753 = vmin.f32 %v752, 1.0
        %v754 = vmax.f32 %v753, -1.0
        %v755 = vmul.f32 %v427, %v427
        %v756 = vmin.f32 16.0, %v755
        %v757 = vmul.f32 %v756, 2.1237322e-06
        %v758 = vadd.f32 %v757, 0.00028619796
        %v759 = vmul.f32 %v756, %v758
        %v760 = vadd.f32 %v759, 0.0036580483
        %v761 = vmul.f32 %v756, %v760
        %v762 = vadd.f32 %v761, 0.05243302
        %v763 = vmul.f32 %v756, %v762
        %v764 = vadd.f32 %v763, 0.18741608
        %v765 = vmul.f32 %v756, %v764
        %v766 = vadd.f32 %v765, 1.1283791
        %v767 = vmul.f32 %v427, %v766
        %v768 = vmul.f32 %v756, 3.8918573e-05
        %v769 = vadd.f32 %v768, 0.001143296
        %v770 = vmul.f32 %v756, %v769
        %v771 = vadd.f32 %v770, 0.014752088
        %v772 = vmul.f32 %v756, %v771
        %v773 = vadd.f32 %v772, 0.112945676
        %v774 = vmul.f32 %v756, %v773
        %v775 = vadd.f32 %v774, 0.4994258
        %v776 = vmul.f32 %v756, %v775
        %v777 = vadd.f32 %v776, 1.0
        %v778 = vrcp.pop %v777
        %v779 = vmul.f32 %v777, %v778
        %v780 = vsub.f32 1.0, %v779
        %v781 = vmul.f32 %v778, %v780
        %v782 = vadd.f32 %v778, %v781
        %vm783 = vweird.f32 %v777
        %vm784 = vweird.f32 %v778
        %vm785 = vmor %vm783, %vm784
        %v786 = vsel %vm785, %v778, %v782
        %v787 = vand.u32 2147483647, %v777
        %vm788 = vcmp.eq.f32.partialorder %v787, 8.507059e+37
        %v789 = vand.u32 %v777, 2147483648
        %v790 = vor.u32 1.1754944e-38, %v789
        %v791 = vsel %vm788, %v790, %v786
        %v792 = vmul.f32 %v767, %v791
        %v793 = vmin.f32 %v792, 1.0
        %v794 = vmax.f32 %v793, -1.0
        %v795 = vmul.f32 %v428, %v428
        %v796 = vmin.f32 16.0, %v795
        %v797 = vmul.f32 %v796, 2.1237322e-06
        %v798 = vadd.f32 %v797, 0.00028619796
        %v799 = vmul.f32 %v796, %v798
        %v800 = vadd.f32 %v799, 0.0036580483
        %v801 = vmul.f32 %v796, %v800
        %v802 = vadd.f32 %v801, 0.05243302
        %v803 = vmul.f32 %v796, %v802
        %v804 = vadd.f32 %v803, 0.18741608
        %v805 = vmul.f32 %v796, %v804
        %v806 = vadd.f32 %v805, 1.1283791
        %v807 = vmul.f32 %v428, %v806
        %v808 = vmul.f32 %v796, 3.8918573e-05
        %v809 = vadd.f32 %v808, 0.001143296
        %v810 = vmul.f32 %v796, %v809
        %v811 = vadd.f32 %v810, 0.014752088
        %v812 = vmul.f32 %v796, %v811
        %v813 = vadd.f32 %v812, 0.112945676
        %v814 = vmul.f32 %v796, %v813
        %v815 = vadd.f32 %v814, 0.4994258
        %v816 = vmul.f32 %v796, %v815
        %v817 = vadd.f32 %v816, 1.0
        %v818 = vrcp.pop %v817
        %v819 = vmul.f32 %v817, %v818
        %v820 = vsub.f32 1.0, %v819
        %v821 = vmul.f32 %v818, %v820
        %v822 = vadd.f32 %v818, %v821
        %vm823 = vweird.f32 %v817
        %vm824 = vweird.f32 %v818
        %vm825 = vmor %vm823, %vm824
        %v826 = vsel %vm825, %v818, %v822
        %v827 = vand.u32 2147483647, %v817
        %vm828 = vcmp.eq.f32.partialorder %v827, 8.507059e+37
        %v829 = vand.u32 %v817, 2147483648
        %v830 = vor.u32 1.1754944e-38, %v829
        %v831 = vsel %vm828, %v830, %v826
        %v832 = vmul.f32 %v807, %v831
        %v833 = vmin.f32 %v832, 1.0
        %v834 = vmax.f32 %v833, -1.0
        %v835 = vmul.f32 %v429, %v429
        %v836 = vmin.f32 16.0, %v835
        %v837 = vmul.f32 %v836, 2.1237322e-06
        %v838 = vadd.f32 %v837, 0.00028619796
        %v839 = vmul.f32 %v836, %v838
        %v840 = vadd.f32 %v839, 0.0036580483
        %v841 = vmul.f32 %v836, %v840
        %v842 = vadd.f32 %v841, 0.05243302
        %v843 = vmul.f32 %v836, %v842
        %v844 = vadd.f32 %v843, 0.18741608
        %v845 = vmul.f32 %v836, %v844
        %v846 = vadd.f32 %v845, 1.1283791
        %v847 = vmul.f32 %v429, %v846
        %v848 = vmul.f32 %v836, 3.8918573e-05
        %v849 = vadd.f32 %v848, 0.001143296
        %v850 = vmul.f32 %v836, %v849
        %v851 = vadd.f32 %v850, 0.014752088
        %v852 = vmul.f32 %v836, %v851
        %v853 = vadd.f32 %v852, 0.112945676
        %v854 = vmul.f32 %v836, %v853
        %v855 = vadd.f32 %v854, 0.4994258
        %v856 = vmul.f32 %v836, %v855
        %v857 = vadd.f32 %v856, 1.0
        %v858 = vrcp.pop %v857
        %v859 = vmul.f32 %v857, %v858
        %v860 = vsub.f32 1.0, %v859
        %v861 = vmul.f32 %v858, %v860
        %v862 = vadd.f32 %v858, %v861
        %vm863 = vweird.f32 %v857
        %vm864 = vweird.f32 %v858
        %vm865 = vmor %vm863, %vm864
        %v866 = vsel %vm865, %v858, %v862
        %v867 = vand.u32 2147483647, %v857
        %vm868 = vcmp.eq.f32.partialorder %v867, 8.507059e+37
        %v869 = vand.u32 %v857, 2147483648
        %v870 = vor.u32 1.1754944e-38, %v869
        %v871 = vsel %vm868, %v870, %v866
        %v872 = vmul.f32 %v847, %v871
        %v873 = vmin.f32 %v872, 1.0
        %v874 = vmax.f32 %v873, -1.0
        %v875 = vmul.f32 %v430, %v430
        %v876 = vmin.f32 16.0, %v875
        %v877 = vmul.f32 %v876, 2.1237322e-06
        %v878 = vadd.f32 %v877, 0.00028619796
        %v879 = vmul.f32 %v876, %v878
        %v880 = vadd.f32 %v879, 0.0036580483
        %v881 = vmul.f32 %v876, %v880
        %v882 = vadd.f32 %v881, 0.05243302
        %v883 = vmul.f32 %v876, %v882
        %v884 = vadd.f32 %v883, 0.18741608
        %v885 = vmul.f32 %v876, %v884
        %v886 = vadd.f32 %v885, 1.1283791
        %v887 = vmul.f32 %v430, %v886
        %v888 = vmul.f32 %v876, 3.8918573e-05
        %v889 = vadd.f32 %v888, 0.001143296
        %v890 = vmul.f32 %v876, %v889
        %v891 = vadd.f32 %v890, 0.014752088
        %v892 = vmul.f32 %v876, %v891
        %v893 = vadd.f32 %v892, 0.112945676
        %v894 = vmul.f32 %v876, %v893
        %v895 = vadd.f32 %v894, 0.4994258
        %v896 = vmul.f32 %v876, %v895
        %v897 = vadd.f32 %v896, 1.0
        %v898 = vrcp.pop %v897
        %v899 = vmul.f32 %v897, %v898
        %v900 = vsub.f32 1.0, %v899
        %v901 = vmul.f32 %v898, %v900
        %v902 = vadd.f32 %v898, %v901
        %vm903 = vweird.f32 %v897
        %vm904 = vweird.f32 %v898
        %vm905 = vmor %vm903, %vm904
        %v906 = vsel %vm905, %v898, %v902
        %v907 = vand.u32 2147483647, %v897
        %vm908 = vcmp.eq.f32.partialorder %v907, 8.507059e+37
        %v909 = vand.u32 %v897, 2147483648
        %v910 = vor.u32 1.1754944e-38, %v909
        %v911 = vsel %vm908, %v910, %v906
        %v912 = vmul.f32 %v887, %v911
        %v913 = vmin.f32 %v912, 1.0
        %v914 = vmax.f32 %v913, -1.0
        %v915 = vmul.f32 %v431, %v431
        %v916 = vmin.f32 16.0, %v915
        %v917 = vmul.f32 %v916, 2.1237322e-06
        %v918 = vadd.f32 %v917, 0.00028619796
        %v919 = vmul.f32 %v916, %v918
        %v920 = vadd.f32 %v919, 0.0036580483
        %v921 = vmul.f32 %v916, %v920
        %v922 = vadd.f32 %v921, 0.05243302
        %v923 = vmul.f32 %v916, %v922
        %v924 = vadd.f32 %v923, 0.18741608
        %v925 = vmul.f32 %v916, %v924
        %v926 = vadd.f32 %v925, 1.1283791
        %v927 = vmul.f32 %v431, %v926
        %v928 = vmul.f32 %v916, 3.8918573e-05
        %v929 = vadd.f32 %v928, 0.001143296
        %v930 = vmul.f32 %v916, %v929
        %v931 = vadd.f32 %v930, 0.014752088
        %v932 = vmul.f32 %v916, %v931
        %v933 = vadd.f32 %v932, 0.112945676
        %v934 = vmul.f32 %v916, %v933
        %v935 = vadd.f32 %v934, 0.4994258
        %v936 = vmul.f32 %v916, %v935
        %v937 = vadd.f32 %v936, 1.0
        %v938 = vrcp.pop %v937
        %v939 = vmul.f32 %v937, %v938
        %v940 = vsub.f32 1.0, %v939
        %v941 = vmul.f32 %v938, %v940
        %v942 = vadd.f32 %v938, %v941
        %vm943 = vweird.f32 %v937
        %vm944 = vweird.f32 %v938
        %vm945 = vmor %vm943, %vm944
        %v946 = vsel %vm945, %v938, %v942
        %v947 = vand.u32 2147483647, %v937
        %vm948 = vcmp.eq.f32.partialorder %v947, 8.507059e+37
        %v949 = vand.u32 %v937, 2147483648
        %v950 = vor.u32 1.1754944e-38, %v949
        %v951 = vsel %vm948, %v950, %v946
        %v952 = vmul.f32 %v927, %v951
        %v953 = vmin.f32 %v952, 1.0
        %v954 = vmax.f32 %v953, -1.0
        %v955 = vmul.f32 %v432, %v432
        %v956 = vmin.f32 16.0, %v955
        %v957 = vmul.f32 %v956, 2.1237322e-06
        %v958 = vadd.f32 %v957, 0.00028619796
        %v959 = vmul.f32 %v956, %v958
        %v960 = vadd.f32 %v959, 0.0036580483
        %v961 = vmul.f32 %v956, %v960
        %v962 = vadd.f32 %v961, 0.05243302
        %v963 = vmul.f32 %v956, %v962
        %v964 = vadd.f32 %v963, 0.18741608
        %v965 = vmul.f32 %v956, %v964
        %v966 = vadd.f32 %v965, 1.1283791
        %v967 = vmul.f32 %v432, %v966
        %v968 = vmul.f32 %v956, 3.8918573e-05
        %v969 = vadd.f32 %v968, 0.001143296
        %v970 = vmul.f32 %v956, %v969
        %v971 = vadd.f32 %v970, 0.014752088
        %v972 = vmul.f32 %v956, %v971
        %v973 = vadd.f32 %v972, 0.112945676
        %v974 = vmul.f32 %v956, %v973
        %v975 = vadd.f32 %v974, 0.4994258
        %v976 = vmul.f32 %v956, %v975
        %v977 = vadd.f32 %v976, 1.0
        %v978 = vrcp.pop %v977
        %v979 = vmul.f32 %v977, %v978
        %v980 = vsub.f32 1.0, %v979
        %v981 = vmul.f32 %v978, %v980
        %v982 = vadd.f32 %v978, %v981
        %vm983 = vweird.f32 %v977
        %vm984 = vweird.f32 %v978
        %vm985 = vmor %vm983, %vm984
        %v986 = vsel %vm985, %v978, %v982
        %v987 = vand.u32 2147483647, %v977
        %vm988 = vcmp.eq.f32.partialorder %v987, 8.507059e+37
        %v989 = vand.u32 %v977, 2147483648
        %v990 = vor.u32 1.1754944e-38, %v989
        %v991 = vsel %vm988, %v990, %v986
        %v992 = vmul.f32 %v967, %v991
        %v993 = vmin.f32 %v992, 1.0
        %v994 = vmax.f32 %v993, -1.0
        %v995 = vmul.f32 %v433, %v433
        %v996 = vmin.f32 16.0, %v995
        %v997 = vmul.f32 %v996, 2.1237322e-06
        %v998 = vadd.f32 %v997, 0.00028619796
        %v999 = vmul.f32 %v996, %v998
        %v1000 = vadd.f32 %v999, 0.0036580483
        %v1001 = vmul.f32 %v996, %v1000
        %v1002 = vadd.f32 %v1001, 0.05243302
        %v1003 = vmul.f32 %v996, %v1002
        %v1004 = vadd.f32 %v1003, 0.18741608
        %v1005 = vmul.f32 %v996, %v1004
        %v1006 = vadd.f32 %v1005, 1.1283791
        %v1007 = vmul.f32 %v433, %v1006
        %v1008 = vmul.f32 %v996, 3.8918573e-05
        %v1009 = vadd.f32 %v1008, 0.001143296
        %v1010 = vmul.f32 %v996, %v1009
        %v1011 = vadd.f32 %v1010, 0.014752088
        %v1012 = vmul.f32 %v996, %v1011
        %v1013 = vadd.f32 %v1012, 0.112945676
        %v1014 = vmul.f32 %v996, %v1013
        %v1015 = vadd.f32 %v1014, 0.4994258
        %v1016 = vmul.f32 %v996, %v1015
        %v1017 = vadd.f32 %v1016, 1.0
        %v1018 = vrcp.pop %v1017
        %v1019 = vmul.f32 %v1017, %v1018
        %v1020 = vsub.f32 1.0, %v1019
        %v1021 = vmul.f32 %v1018, %v1020
        %v1022 = vadd.f32 %v1018, %v1021
        %vm1023 = vweird.f32 %v1017
        %vm1024 = vweird.f32 %v1018
        %vm1025 = vmor %vm1023, %vm1024
        %v1026 = vsel %vm1025, %v1018, %v1022
        %v1027 = vand.u32 2147483647, %v1017
        %vm1028 = vcmp.eq.f32.partialorder %v1027, 8.507059e+37
        %v1029 = vand.u32 %v1017, 2147483648
        %v1030 = vor.u32 1.1754944e-38, %v1029
        %v1031 = vsel %vm1028, %v1030, %v1026
        %v1032 = vmul.f32 %v1007, %v1031
        %v1033 = vmin.f32 %v1032, 1.0
        %v1034 = vmax.f32 %v1033, -1.0
        %v1035 = vmul.f32 %v434, %v434
        %v1036 = vmin.f32 16.0, %v1035
        %v1037 = vmul.f32 %v1036, 2.1237322e-06
        %v1038 = vadd.f32 %v1037, 0.00028619796
        %v1039 = vmul.f32 %v1036, %v1038
        %v1040 = vadd.f32 %v1039, 0.0036580483
        %v1041 = vmul.f32 %v1036, %v1040
        %v1042 = vadd.f32 %v1041, 0.05243302
        %v1043 = vmul.f32 %v1036, %v1042
        %v1044 = vadd.f32 %v1043, 0.18741608
        %v1045 = vmul.f32 %v1036, %v1044
        %v1046 = vadd.f32 %v1045, 1.1283791
        %v1047 = vmul.f32 %v434, %v1046
        %v1048 = vmul.f32 %v1036, 3.8918573e-05
        %v1049 = vadd.f32 %v1048, 0.001143296
        %v1050 = vmul.f32 %v1036, %v1049
        %v1051 = vadd.f32 %v1050, 0.014752088
        %v1052 = vmul.f32 %v1036, %v1051
        %v1053 = vadd.f32 %v1052, 0.112945676
        %v1054 = vmul.f32 %v1036, %v1053
        %v1055 = vadd.f32 %v1054, 0.4994258
        %v1056 = vmul.f32 %v1036, %v1055
        %v1057 = vadd.f32 %v1056, 1.0
        %v1058 = vrcp.pop %v1057
        %v1059 = vmul.f32 %v1057, %v1058
        %v1060 = vsub.f32 1.0, %v1059
        %v1061 = vmul.f32 %v1058, %v1060
        %v1062 = vadd.f32 %v1058, %v1061
        %vm1063 = vweird.f32 %v1057
        %vm1064 = vweird.f32 %v1058
        %vm1065 = vmor %vm1063, %vm1064
        %v1066 = vsel %vm1065, %v1058, %v1062
        %v1067 = vand.u32 2147483647, %v1057
        %vm1068 = vcmp.eq.f32.partialorder %v1067, 8.507059e+37
        %v1069 = vand.u32 %v1057, 2147483648
        %v1070 = vor.u32 1.1754944e-38, %v1069
        %v1071 = vsel %vm1068, %v1070, %v1066
        %v1072 = vmul.f32 %v1047, %v1071
        %v1073 = vmin.f32 %v1072, 1.0
        %v1074 = vmax.f32 %v1073, -1.0
        %v1075 = vadd.f32 %v474, 1.0
        %v1076 = vadd.f32 %v514, 1.0
        %v1077 = vadd.f32 %v554, 1.0
        %v1078 = vadd.f32 %v594, 1.0
        %v1079 = vadd.f32 %v634, 1.0
        %v1080 = vadd.f32 %v674, 1.0
        %v1081 = vadd.f32 %v714, 1.0
        %v1082 = vadd.f32 %v754, 1.0
        %v1083 = vadd.f32 %v794, 1.0
        %v1084 = vadd.f32 %v834, 1.0
        %v1085 = vadd.f32 %v874, 1.0
        %v1086 = vadd.f32 %v914, 1.0
        %v1087 = vadd.f32 %v954, 1.0
        %v1088 = vadd.f32 %v994, 1.0
        %v1089 = vadd.f32 %v1034, 1.0
        %v1090 = vadd.f32 %v1074, 1.0
        %v1091 = vmul.f32 %v403, %v1075
        %v1092 = vmul.f32 %v404, %v1076
        %v1093 = vmul.f32 %v405, %v1077
        %v1094 = vmul.f32 %v406, %v1078
        %v1095 = vmul.f32 %v407, %v1079
        %v1096 = vmul.f32 %v408, %v1080
        %v1097 = vmul.f32 %v409, %v1081
        %v1098 = vmul.f32 %v410, %v1082
        %v1099 = vmul.f32 %v411, %v1083
        %v1100 = vmul.f32 %v412, %v1084
        %v1101 = vmul.f32 %v413, %v1085
        %v1102 = vmul.f32 %v414, %v1086
        %v1103 = vmul.f32 %v415, %v1087
        %v1104 = vmul.f32 %v416, %v1088
        %v1105 = vmul.f32 %v417, %v1089
        %v1106 = vmul.f32 %v418, %v1090
        %v1107 = vld [vmem:[#allocation2] sm:$0xff]
        %v1108 = vld [vmem:[#allocation2 + $0x8] sm:$0xff]
        %v1109 = vld [vmem:[#allocation2 + $0x10] sm:$0xff]
        %v1110 = vld [vmem:[#allocation2 + $0x18] sm:$0xff]
        %v1111 = vld [vmem:[#allocation2 + $0x20] sm:$0xff]
        %v1112 = vld [vmem:[#allocation2 + $0x28] sm:$0xff]
        %v1113 = vld [vmem:[#allocation2 + $0x30] sm:$0xff]
        %v1114 = vld [vmem:[#allocation2 + $0x38] sm:$0xff]
        %v1115 = vld [vmem:[#allocation2 + $0x40] sm:$0xff]
        %v1116 = vld [vmem:[#allocation2 + $0x48] sm:$0xff]
        %v1117 = vld [vmem:[#allocation2 + $0x50] sm:$0xff]
        %v1118 = vld [vmem:[#allocation2 + $0x58] sm:$0xff]
        %v1119 = vld [vmem:[#allocation2 + $0x60] sm:$0xff]
        %v1120 = vld [vmem:[#allocation2 + $0x68] sm:$0xff]
        %v1121 = vld [vmem:[#allocation2 + $0x70] sm:$0xff]
        %v1122 = vld [vmem:[#allocation2 + $0x78] sm:$0xff]
        %v1123 = vld [vmem:[%s249] sm:$0xff]
        %v1124 = vld [vmem:[%s249 + $0x8] sm:$0xff]
        %v1125 = vld [vmem:[%s249 + $0x10] sm:$0xff]
        %v1126 = vld [vmem:[%s249 + $0x18] sm:$0xff]
        %v1127 = vld [vmem:[%s249 + $0x20] sm:$0xff]
        %v1128 = vld [vmem:[%s249 + $0x28] sm:$0xff]
        %v1129 = vld [vmem:[%s249 + $0x30] sm:$0xff]
        %v1130 = vld [vmem:[%s249 + $0x38] sm:$0xff]
        %v1131 = vld [vmem:[%s249 + $0x40] sm:$0xff]
        %v1132 = vld [vmem:[%s249 + $0x48] sm:$0xff]
        %v1133 = vld [vmem:[%s249 + $0x50] sm:$0xff]
        %v1134 = vld [vmem:[%s249 + $0x58] sm:$0xff]
        %v1135 = vld [vmem:[%s249 + $0x60] sm:$0xff]
        %v1136 = vld [vmem:[%s249 + $0x68] sm:$0xff]
        %v1137 = vld [vmem:[%s249 + $0x70] sm:$0xff]
        %v1138 = vld [vmem:[%s249 + $0x78] sm:$0xff]
        %1139 = vmatpush.msra.mxu0 %v1138
        %1140 = vmatpush.msra.mxu0 %v1137
        %1141 = vmatpush.msra.mxu0 %v1136
        %1142 = vmatpush.msra.mxu0 %v1135
        %1143 = vmatpush.msra.mxu0 %v1134
        %1144 = vmatpush.msra.mxu0 %v1133
        %1145 = vmatpush.msra.mxu0 %v1132
        %1146 = vmatpush.msra.mxu0 %v1131
        %1147 = vmatpush.msra.mxu0 %v1130
        %1148 = vmatpush.msra.mxu0 %v1129
        %1149 = vmatpush.msra.mxu0 %v1128
        %1150 = vmatpush.msra.mxu0 %v1127
        %1151 = vmatpush.msra.mxu0 %v1126
        %1152 = vmatpush.msra.mxu0 %v1125
        %1153 = vmatpush.msra.mxu0 %v1124
        %1154 = vmatpush.msra.mxu0 %v1123
        %1155 = vmatmul.f32.gmra.mxu0 %v1091
        %v1156 = vpop.f32.mrf.mxu0
        %v1157 = vadd.f32 0.0, %v1156
        %1158 = vmatmul.f32.gmra.mxu0 %v1092
        %v1159 = vpop.f32.mrf.mxu0
        %v1160 = vadd.f32 0.0, %v1159
        %1161 = vmatmul.f32.gmra.mxu0 %v1093
        %v1162 = vpop.f32.mrf.mxu0
        %v1163 = vadd.f32 0.0, %v1162
        %1164 = vmatmul.f32.gmra.mxu0 %v1094
        %v1165 = vpop.f32.mrf.mxu0
        %v1166 = vadd.f32 0.0, %v1165
        %1167 = vmatmul.f32.gmra.mxu0 %v1095
        %v1168 = vpop.f32.mrf.mxu0
        %v1169 = vadd.f32 0.0, %v1168
        %1170 = vmatmul.f32.gmra.mxu0 %v1096
        %v1171 = vpop.f32.mrf.mxu0
        %v1172 = vadd.f32 0.0, %v1171
        %1173 = vmatmul.f32.gmra.mxu0 %v1097
        %v1174 = vpop.f32.mrf.mxu0
        %v1175 = vadd.f32 0.0, %v1174
        %1176 = vmatmul.f32.gmra.mxu0 %v1098
        %v1177 = vpop.f32.mrf.mxu0
        %v1178 = vadd.f32 0.0, %v1177
        %1179 = vmatmul.f32.gmra.mxu0 %v1099
        %v1180 = vpop.f32.mrf.mxu0
        %v1181 = vadd.f32 0.0, %v1180
        %1182 = vmatmul.f32.gmra.mxu0 %v1100
        %v1183 = vpop.f32.mrf.mxu0
        %v1184 = vadd.f32 0.0, %v1183
        %1185 = vmatmul.f32.gmra.mxu0 %v1101
        %v1186 = vpop.f32.mrf.mxu0
        %v1187 = vadd.f32 0.0, %v1186
        %1188 = vmatmul.f32.gmra.mxu0 %v1102
        %v1189 = vpop.f32.mrf.mxu0
        %v1190 = vadd.f32 0.0, %v1189
        %1191 = vmatmul.f32.gmra.mxu0 %v1103
        %v1192 = vpop.f32.mrf.mxu0
        %v1193 = vadd.f32 0.0, %v1192
        %1194 = vmatmul.f32.gmra.mxu0 %v1104
        %v1195 = vpop.f32.mrf.mxu0
        %v1196 = vadd.f32 0.0, %v1195
        %1197 = vmatmul.f32.gmra.mxu0 %v1105
        %v1198 = vpop.f32.mrf.mxu0
        %v1199 = vadd.f32 0.0, %v1198
        %1200 = vmatmul.f32.gmra.mxu0 %v1106
        %v1201 = vpop.f32.mrf.mxu0
        %v1202 = vadd.f32 0.0, %v1201
        %1203 = vdwg.mxu0
        %v1204 = vadd.f32 %v1107, %v1157
        %v1205 = vadd.f32 %v1108, %v1160
        %v1206 = vadd.f32 %v1109, %v1163
        %v1207 = vadd.f32 %v1110, %v1166
        %v1208 = vadd.f32 %v1111, %v1169
        %v1209 = vadd.f32 %v1112, %v1172
        %v1210 = vadd.f32 %v1113, %v1175
        %v1211 = vadd.f32 %v1114, %v1178
        %v1212 = vadd.f32 %v1115, %v1181
        %v1213 = vadd.f32 %v1116, %v1184
        %v1214 = vadd.f32 %v1117, %v1187
        %v1215 = vadd.f32 %v1118, %v1190
        %v1216 = vadd.f32 %v1119, %v1193
        %v1217 = vadd.f32 %v1120, %v1196
        %v1218 = vadd.f32 %v1121, %v1199
        %v1219 = vadd.f32 %v1122, %v1202
        %1220 = vst [vmem:[#allocation2] sm:$0xff] %v1204
        %1221 = vst [vmem:[#allocation2 + $0x8] sm:$0xff] %v1205
        %1222 = vst [vmem:[#allocation2 + $0x10] sm:$0xff] %v1206
        %1223 = vst [vmem:[#allocation2 + $0x18] sm:$0xff] %v1207
        %1224 = vst [vmem:[#allocation2 + $0x20] sm:$0xff] %v1208
        %1225 = vst [vmem:[#allocation2 + $0x28] sm:$0xff] %v1209
        %1226 = vst [vmem:[#allocation2 + $0x30] sm:$0xff] %v1210
        %1227 = vst [vmem:[#allocation2 + $0x38] sm:$0xff] %v1211
        %1228 = vst [vmem:[#allocation2 + $0x40] sm:$0xff] %v1212
        %1229 = vst [vmem:[#allocation2 + $0x48] sm:$0xff] %v1213
        %1230 = vst [vmem:[#allocation2 + $0x50] sm:$0xff] %v1214
        %1231 = vst [vmem:[#allocation2 + $0x58] sm:$0xff] %v1215
        %1232 = vst [vmem:[#allocation2 + $0x60] sm:$0xff] %v1216
        %1233 = vst [vmem:[#allocation2 + $0x68] sm:$0xff] %v1217
        %1234 = vst [vmem:[#allocation2 + $0x70] sm:$0xff] %v1218
        %1235 = vst [vmem:[#allocation2 + $0x78] sm:$0xff] %v1219
        %p1236 = scmp.eq.s32.totalorder %s28, 1
        // Predicated region
        $region49: #{tpu_custom_call.1} parent=31 // pred_check
          %p1237 = pneg %p1236
        $region50: #{tpu_custom_call.1} parent=31 // pred_check_branch
          %1239 = sbr.rel (%p1237) target = $region52
        $region51: #{tpu_custom_call.1} parent=31 // pred_region
          %v1240 = vld [vmem:[#allocation2] sm:$0xff]
          %v1241 = vld [vmem:[#allocation2 + $0x8] sm:$0xff]
          %v1242 = vld [vmem:[#allocation2 + $0x10] sm:$0xff]
          %v1243 = vld [vmem:[#allocation2 + $0x18] sm:$0xff]
          %v1244 = vld [vmem:[#allocation2 + $0x20] sm:$0xff]
          %v1245 = vld [vmem:[#allocation2 + $0x28] sm:$0xff]
          %v1246 = vld [vmem:[#allocation2 + $0x30] sm:$0xff]
          %v1247 = vld [vmem:[#allocation2 + $0x38] sm:$0xff]
          %v1248 = vld [vmem:[#allocation2 + $0x40] sm:$0xff]
          %v1249 = vld [vmem:[#allocation2 + $0x48] sm:$0xff]
          %v1250 = vld [vmem:[#allocation2 + $0x50] sm:$0xff]
          %v1251 = vld [vmem:[#allocation2 + $0x58] sm:$0xff]
          %v1252 = vld [vmem:[#allocation2 + $0x60] sm:$0xff]
          %v1253 = vld [vmem:[#allocation2 + $0x68] sm:$0xff]
          %v1254 = vld [vmem:[#allocation2 + $0x70] sm:$0xff]
          %v1255 = vld [vmem:[#allocation2 + $0x78] sm:$0xff]
          %1256 = vst [vmem:[%s282] sm:$0xff] %v1240
          %1257 = vst [vmem:[%s282 + $0x8] sm:$0xff] %v1241
          %1258 = vst [vmem:[%s282 + $0x10] sm:$0xff] %v1242
          %1259 = vst [vmem:[%s282 + $0x18] sm:$0xff] %v1243
          %1260 = vst [vmem:[%s282 + $0x20] sm:$0xff] %v1244
          %1261 = vst [vmem:[%s282 + $0x28] sm:$0xff] %v1245
          %1262 = vst [vmem:[%s282 + $0x30] sm:$0xff] %v1246
          %1263 = vst [vmem:[%s282 + $0x38] sm:$0xff] %v1247
          %1264 = vst [vmem:[%s282 + $0x40] sm:$0xff] %v1248
          %1265 = vst [vmem:[%s282 + $0x48] sm:$0xff] %v1249
          %1266 = vst [vmem:[%s282 + $0x50] sm:$0xff] %v1250
          %1267 = vst [vmem:[%s282 + $0x58] sm:$0xff] %v1251
          %1268 = vst [vmem:[%s282 + $0x60] sm:$0xff] %v1252
          %1269 = vst [vmem:[%s282 + $0x68] sm:$0xff] %v1253
          %1270 = vst [vmem:[%s282 + $0x70] sm:$0xff] %v1254
          %1271 = vst [vmem:[%s282 + $0x78] sm:$0xff] %v1255
        $region52: #{tpu_custom_call.1} parent=31 // pred_fallthru
          _
        %s1272 = sand.u32 %s121, 1
        %s1273 = scalar_lea.sflag [#allocation5], %s1272
        %s1274 = sand.u32 %s121, 1
        %s1275 = smul.addr %s1274, 128
        %s1276 = scalar_lea.vmem [#allocation9], %s1275
        // Predicated region
        $region53: #{tpu_custom_call.1} parent=31 // pred_check
          %p1277 = pneg %p131
        $region54: #{tpu_custom_call.1} parent=31 // pred_check_branch
          %1279 = sbr.rel (%p1277) target = $region56
        $region55: #{tpu_custom_call.1} parent=31 // pred_region
          %s1280 = smul.u32 16, %s27
          %1282 = vsyncadd %s1273, 0
          %s1283 = smul.addr %s1280, 8
          %s1284 = scalar_lea.hbm %s3, %s1283
          %s1285 = sshll.u32 %s1276, 4
          %s1286 = int_to_ptr.vmem [resolvable:$true] %s1285
          %s1287 = sshll.u32 %s1284, 4
          %s1288 = int_to_ptr.hbm [resolvable:$true] %s1287
          %1293 = dma.vmem_to_hbm [thread:$0]  %s1286, 2048, %s1288, %s1273, 128, 128, 8
        $region56: #{tpu_custom_call.1} parent=31 // pred_fallthru
          _
      $region32: #{tpu_custom_call.1} parent=5 // pred_fallthru
        _
      %p1294 = scmp.le.s32.totalorder 2, %s18
      // Predicated region
      $region57: #{tpu_custom_call.1} parent=5 // pred_check
        %p1295 = pneg %p1294
      $region58: #{tpu_custom_call.1} parent=5 // pred_check_branch
        %1297 = sbr.rel (%p1295) target = $region60
      $region59: #{tpu_custom_call.1} parent=5 // pred_region
        %s1298 = ssub.s32 %s18, 2
        // Predicated region
        $region61: #{tpu_custom_call.1} parent=59 // pred_check
          %p1299 = pneg %p137
        $region62: #{tpu_custom_call.1} parent=59 // pred_check_branch
          %1301 = sbr.rel (%p1299) target = $region64
        $region63: #{tpu_custom_call.1} parent=59 // pred_region
          %s1302 = sand.u32 %s122, 1
          %s1303 = scalar_lea.sflag [#allocation5], %s1302
          %s1304 = sand.u32 %s122, 1
          %s1305 = smul.addr %s1304, 128
          %s1306 = scalar_lea.vmem [#allocation9], %s1305
          %1308 = dma.done %s1303, 2048
        $region64: #{tpu_custom_call.1} parent=59 // pred_fallthru
          _
      $region60: #{tpu_custom_call.1} parent=5 // pred_fallthru
        _
    $region6: #{tpu_custom_call.1} parent=1 // loop_footer
      %s22 = sadd.s32 1, %s18
    $region7: #{tpu_custom_call.1} parent=1 // loop_footer_branch
      %17 = sbr.rel target = $region3
    $region8: #{tpu_custom_call.1} parent=1 // loop_exit
      _
    %1309 = vsyncpa [#allocation4], 1
    %s1310 = scalar_lea.sflag [#allocation4], 1
    %1311 = vsyncpa %s1310, 1
    %1312 = vsyncpa [#allocation7], 1
    %s1313 = scalar_lea.sflag [#allocation7], 1
    %1314 = vsyncpa %s1313, 1
    %1315 = vsyncpa [#allocation5], 1
    %s1316 = scalar_lea.sflag [#allocation5], 1
    %1317 = vsyncpa %s1316, 1

</llo_original>
